<compile_context>
chip_gen: v6e
topology: v6e:2x2x1
jax: 0.10.0
libtpu: 0.0.40
codegen_flags: <defaults>
</compile_context>

<pallas_src>
import jax
import jax.numpy as jnp
from jax.experimental import pallas as pl
from jax.experimental.pallas import tpu as pltpu


_TARGET_TILE_BYTES = 4 * 1024 * 1024  # ~4 MiB x tile: good on v7x/v6e, still fine on v5e


def _round_up(x, m):
    return (x + m - 1) // m * m


def _cdiv(a, b):
    return -(-a // b)


# ----------------------------- Pallas kernel ---------------------------------
def _td_mask_mul_kernel(x_ref, m_ref, o_ref):
    # x_ref / o_ref: (block_rows, L) tile. m_ref: (block_rows, 1) scaled per-row mask.
    o_ref[...] = x_ref[...] * m_ref[...]


def _apply_mask_pallas(x2d, m_col, donate_input=False):
    """x2d: (R, L); m_col: (R, 1) scaled per-row mask (same dtype). Returns x2d * m_col."""
    R, L = x2d.shape
    itemsize = jnp.dtype(x2d.dtype).itemsize
    sub = 8 * (4 // itemsize)          # sublane multiple: 8 (f32) / 16 (bf16) / 32 (int8)
    lane_pad_L = _round_up(L, 128)     # VMEM lane padding of the last dim (layout only)

    # Row-tile sizing: target ~4 MiB x tiles (VMEM footprint), balanced across an even
    # number of grid steps so v7x's two TensorCores get equal work on the parallel axis.
    bytes_per_row = lane_pad_L * itemsize
    cap_rows = max(sub, (_TARGET_TILE_BYTES // bytes_per_row) // sub * sub)
    num_steps = _cdiv(R, cap_rows)
    if num_steps == 1 and R > sub:
        num_steps = 2                  # >=2 steps: software pipelining + megacore sharding
    if num_steps > 1 and num_steps % 2 == 1:
        num_steps += 1                 # even split across v7x's 2 TensorCores
    num_steps = min(num_steps, max(1, _cdiv(R, sub)))
    block_rows = min(_round_up(_cdiv(R, num_steps), sub), _round_up(R, sub))
    grid_steps = _cdiv(R, block_rows)  # ragged tail block: Pallas masks the OOB writes

    # VMEM budget: double-buffered in + out x tiles plus the small per-step mask block
    # (lane-padded to 128). Cap at 48 MiB (v7x physical VMEM is 64 MiB per TC).
    tile_x_bytes = block_rows * lane_pad_L * itemsize
    tile_m_bytes = block_rows * 128 * itemsize
    vmem_need = 2 * (2 * tile_x_bytes + tile_m_bytes) + (1 << 20)
    vmem_limit = int(min(48 * 1024 * 1024, max(32 * 1024 * 1024, vmem_need)))

    extra_kwargs = {}
    if donate_input:
        # Only pays off when x2d's buffer is actually donatable; otherwise XLA inserts a
        # defensive copy that negates the in-place intent, so this is opt-in.
        extra_kwargs["input_output_aliases"] = {0: 0}

    return pl.pallas_call(
        _td_mask_mul_kernel,
        out_shape=jax.ShapeDtypeStruct((R, L), x2d.dtype),
        grid_spec=pltpu.PrefetchScalarGridSpec(
            num_scalar_prefetch=0,
            grid=(grid_steps,),
            in_specs=[
                # Full-extent last dim (exempt from the 128-divisibility rule): no padding.
                pl.BlockSpec((block_rows, L), lambda i: (i, 0)),
                # Per-step mask block: few-KB DMA hidden behind the multi-MiB tile DMA.
                pl.BlockSpec((block_rows, 1), lambda i: (i, 0)),
            ],
            out_specs=pl.BlockSpec((block_rows, L), lambda i: (i, 0)),
        ),
        compiler_params=pltpu.CompilerParams(
            dimension_semantics=("parallel",),
            vmem_limit_bytes=vmem_limit,
        ),
        cost_estimate=pl.CostEstimate(
            flops=R * L,
            transcendentals=0,
            bytes_accessed=2 * R * L * itemsize + R * itemsize,
        ),
        **extra_kwargs,
    )(x2d, m_col)


# ---------------------------- mask construction -------------------------------
def _build_scaled_mask(key, C, targeted_index, dropout_rate):
    """Replicates Targeted_Dropout_Function mask semantics (scaled per-channel mask)."""
    if targeted_index is not None:
        ti = jnp.asarray(targeted_index, jnp.int32)
        target_prob = jax.random.uniform(key, (ti.shape[0],))
        drop = target_prob < dropout_rate                # targeted channels that drop
        mask = jnp.ones((C,), jnp.float32).at[ti].set(jnp.where(drop, 0.0, 1.0))
        # PyTorch: keep_rate = 1 - len(filtered target_index) / C  (filtered == dropped)
        n_dropped = jnp.sum(drop.astype(jnp.float32))
        keep_rate = 1.0 - n_dropped / C
    else:
        mask_prob = jax.random.uniform(key, (C,))
        mask = jnp.where(mask_prob < dropout_rate, 0.0, 1.0).astype(jnp.float32)
        keep_rate = jnp.asarray(1.0 - dropout_rate, jnp.float32)
    scale_rate = jnp.where(keep_rate > 0.0, 1.0 / keep_rate, 0.0)
    return mask * scale_rate                             # (C,)


# ------------------------------ module forward --------------------------------
def targeted_dropout_forward(x, key, targeted_index=None, dropout=0.5, train=True,
                             donate_input=False):
    """Forward of Targeted_Dropout. x: (N, C, H, W)."""
    if not train:
        return x
    N, C, H, W = x.shape
    mask_c = _build_scaled_mask(key, C, targeted_index, dropout)         # (C,)
    m_col = jnp.tile(mask_c, (N,)).reshape(N * C, 1).astype(x.dtype)     # (N*C, 1) tiny
    x2d = x.reshape(N * C, H * W)
    out2d = _apply_mask_pallas(x2d, m_col, donate_input=donate_input)
    return out2d.reshape(N, C, H, W)


# ------------------------------- pure-JAX ref ----------------------------------
def _reference(x, key, targeted_index, dropout, train):
    if not train:
        return x
    N, C, H, W = x.shape
    mask_c = _build_scaled_mask(key, C, targeted_index, dropout)
    return x * mask_c.reshape(1, C, 1, 1).astype(x.dtype)


if __name__ == "__main__":
    key = jax.random.PRNGKey(0)
    kx, kd1, kd2, kx2, kd3 = jax.random.split(key, 5)

    # Small shapes consistent with a conv->bn->relu block activation.
    x = jax.random.normal(kx, (2, 4, 16, 16), jnp.float32)
    targeted_index = jnp.array([0, 2], jnp.int32)   # channels with low BN weight magnitude

    # train mode, targeted indices given
    out_t = targeted_dropout_forward(x, kd1, targeted_index=targeted_index,
                                     dropout=0.5, train=True)
    # train mode, no targeted indices (plain per-channel dropout)
    out_n = targeted_dropout_forward(x, kd2, targeted_index=None,
                                     dropout=0.5, train=True)
    # eval mode: identity
    out_e = targeted_dropout_forward(x, kd1, targeted_index=targeted_index,
                                     dropout=0.5, train=False)

    # Exercise the ragged paths: rows not multiple of 8, spatial not multiple of 128.
    x2 = jax.random.normal(kx2, (3, 5, 14, 14), jnp.float32)   # R=15, L=196
    out_p = targeted_dropout_forward(x2, kd3, targeted_index=None,
                                     dropout=0.5, train=True)

    jax.block_until_ready((out_t, out_n, out_e, out_p))

    ref_t = _reference(x, kd1, targeted_index, 0.5, True)
    ref_n = _reference(x, kd2, None, 0.5, True)
    ref_p = _reference(x2, kd3, None, 0.5, True)

    assert out_t.shape == x.shape and out_t.dtype == x.dtype
    assert jnp.allclose(out_t, ref_t, atol=1e-6)
    assert jnp.allclose(out_n, ref_n, atol=1e-6)
    assert jnp.allclose(out_e, x)
    assert out_p.shape == x2.shape
    assert jnp.allclose(out_p, ref_p, atol=1e-6)

    print("KERNEL_OK")
</pallas_src>

<mosaic_0001>
module attributes {stable_mosaic.version = 11 : i64} {
  func.func @_td_mask_mul_kernel(%arg0: i32, %arg1: memref<8x256xf32, #tpu.memory_space<vmem>>, %arg2: memref<8x1xf32, #tpu.memory_space<vmem>>, %arg3: memref<8x256xf32, #tpu.memory_space<vmem>>) attributes {dimension_semantics = [#tpu.dimension_semantics<parallel>], iteration_bounds = array<i64: 1>, scalar_prefetch = 0 : i64, scratch_operands = 0 : i64, tpu.core_type = #tpu.core_type<tc>, window_params = [{transform_indices = @transform_0, window_bounds = array<i64: 8, 256>}, {transform_indices = @transform_1, window_bounds = array<i64: 8, 1>}, {transform_indices = @transform_2, window_bounds = array<i64: 8, 256>}]} {
    %c0 = arith.constant 0 : index
    %c0_0 = arith.constant 0 : index
    %0 = vector.load %arg1[%c0, %c0_0] : memref<8x256xf32, #tpu.memory_space<vmem>>, vector<8x256xf32>
    %c0_1 = arith.constant 0 : index
    %c0_2 = arith.constant 0 : index
    %1 = vector.load %arg2[%c0_1, %c0_2] : memref<8x1xf32, #tpu.memory_space<vmem>>, vector<8x1xf32>
    %2 = vector.broadcast %1 : vector<8x1xf32> to vector<8x256xf32>
    %3 = arith.mulf %0, %2 : vector<8x256xf32>
    %c0_3 = arith.constant 0 : index
    %c0_4 = arith.constant 0 : index
    %4 = vector.load %arg3[%c0_3, %c0_4] : memref<8x256xf32, #tpu.memory_space<vmem>>, vector<8x256xf32>
    tpu.vector_store %arg3[%c0_3, %c0_4], %3 {strides = array<i32>} : memref<8x256xf32, #tpu.memory_space<vmem>>, vector<8x256xf32>,
    return
  }
  func.func @transform_0(%arg0: i32) -> (i32, i32) {
    %c0_i32 = arith.constant 0 : i32
    %c0_i32_0 = arith.constant 0 : i32
    return %arg0, %c0_i32 : i32, i32
  }
  func.func @transform_1(%arg0: i32) -> (i32, i32) {
    %c0_i32 = arith.constant 0 : i32
    %c0_i32_0 = arith.constant 0 : i32
    return %arg0, %c0_i32 : i32, i32
  }
  func.func @transform_2(%arg0: i32) -> (i32, i32) {
    %c0_i32 = arith.constant 0 : i32
    %c0_i32_0 = arith.constant 0 : i32
    return %arg0, %c0_i32 : i32, i32
  }
}

</mosaic_0001>

<llo_original>
// kernel: tpu_custom_call.1
$region0: #{tpu_custom_call.1}
  #allocation0 [shape = 'u32[]', space=smem, size = 0x4, offset = 0x4, fixed_abs, tag = 'smem constant byte address 0x4 - core index']
  #allocation1 [shape = 'u32[144,128]{1,0:T(1,128)}', space=vmem, size = 0x12000, scoped, tag = 'internal scratch']
  %s0 = inlined_call_operand.hbm [shape: f32[8,256], index: 0, kind: input, shape index: {}]
  %s1 = inlined_call_operand.vmem [shape: f32[8,1], index: 1, kind: input, shape index: {}]
  %s2 = inlined_call_operand.hbm [shape: f32[8,256], index: 2, kind: output, shape index: {}]
  %s3 = sld [smem:[#allocation0]]
  $region22: #{tpu_custom_call.1} parent=0
    _
  %s5 = ssub.s32 1, %s3
  %s6 = scalar_select 0, %s5, %s3
  $region1: #{tpu_custom_call.1} parent=0
    #allocation2 [shape = 'u8[8192]{0}', space=vmem, size = 0x2000, scoped, tag = 'input window, operand 0, single buffered']
    #allocation3 [shape = 's32[1]{0}', space=sflag, size = 0x4, scoped, tag = 'scoped memory for tpu_custom_call.1']
    #allocation4 [shape = 's32[1]{0}', space=sflag, size = 0x4, scoped, tag = 'scoped memory for tpu_custom_call.1']
    #allocation5 [shape = 'u8[8192]{0}', space=vmem, size = 0x2000, scoped, tag = 'output window, operand 0, single buffered']
    %7 = vsyncpa [#allocation3], 0
    %8 = vsyncpa [#allocation4], 0
    // Predicated region
    $region2: #{tpu_custom_call.1} parent=1 // pred_check
      _
    $region3: #{tpu_custom_call.1} parent=1 // pred_check_branch
      %10 = sbr.rel (0) target = $region5
    $region4: #{tpu_custom_call.1} parent=1 // pred_region
      %s12 = ssub.s32 256, 256
      %13 = vsyncadd [#allocation3], %s12
      %s15 = sshll.u32 [#allocation2], 4
      %s16 = int_to_ptr.vmem [resolvable:$true] %s15
      %18 = dma.hbm_to_vmem [thread:$0]  %s0, 256, %s16, [#allocation3]
    $region5: #{tpu_custom_call.1} parent=1 // pred_fallthru
      _
    // Predicated region
    $region6: #{tpu_custom_call.1} parent=1 // pred_check
      _
    $region7: #{tpu_custom_call.1} parent=1 // pred_check_branch
      %20 = sbr.rel (0) target = $region9
    $region8: #{tpu_custom_call.1} parent=1 // pred_region
      _
    $region9: #{tpu_custom_call.1} parent=1 // pred_fallthru
      _
    // Predicated region
    $region10: #{tpu_custom_call.1} parent=1 // pred_check
      _
    $region11: #{tpu_custom_call.1} parent=1 // pred_check_branch
      %22 = sbr.rel (0) target = $region13
    $region12: #{tpu_custom_call.1} parent=1 // pred_region
      %23 = dma.done [#allocation3], 256
    $region13: #{tpu_custom_call.1} parent=1 // pred_fallthru
      _
    %v24 = vld [vmem:[#allocation2] sm:$0xff]
    %v25 = vld [vmem:[#allocation2 + $0x8] sm:$0xff]
    %v26 = vld [vmem:[%s1] sm:$0xff]
    %28 = vset.pattern.permute.xlu0 0
    %29 = vperm.xlu0 %28, %v26
    %v30 = vpop.permute.xlu0 %29
    %v32 = vmul.f32 %v24, %v30
    %v33 = vmul.f32 %v25, %v30
    %34 = vst [vmem:[#allocation5] sm:$0xff] %v32
    %35 = vst [vmem:[#allocation5 + $0x8] sm:$0xff] %v33
    // Predicated region
    $region14: #{tpu_custom_call.1} parent=1 // pred_check
      _
    $region15: #{tpu_custom_call.1} parent=1 // pred_check_branch
      %37 = sbr.rel (0) target = $region17
    $region16: #{tpu_custom_call.1} parent=1 // pred_region
      %s39 = ssub.s32 256, 256
      %40 = vsyncadd [#allocation4], %s39
      %s42 = sshll.u32 [#allocation5], 4
      %s43 = int_to_ptr.vmem [resolvable:$true] %s42
      %45 = dma.vmem_to_hbm [thread:$0]  %s43, 256, %s2, [#allocation4]
    $region17: #{tpu_custom_call.1} parent=1 // pred_fallthru
      _
    // Predicated region
    $region18: #{tpu_custom_call.1} parent=1 // pred_check
      _
    $region19: #{tpu_custom_call.1} parent=1 // pred_check_branch
      %47 = sbr.rel (0) target = $region21
    $region20: #{tpu_custom_call.1} parent=1 // pred_region
      %48 = dma.done [#allocation4], 256
    $region21: #{tpu_custom_call.1} parent=1 // pred_fallthru
      _
    %49 = vsyncpa [#allocation3], 1
    %50 = vsyncpa [#allocation4], 1

</llo_original>
